<compile_context>
chip_gen: v7x
topology: tpu7x:2x2x1
jax: 0.10.0
libtpu: 0.0.40
codegen_flags: <defaults>
</compile_context>

<pallas_src>
import functools

import jax
import jax.numpy as jnp
from jax.experimental import pallas as pl
from jax.experimental.pallas import tpu as pltpu

LN_EPS = 1e-5


def hidden_kernel(x_ref, wt_ref, p_ref, o_ref):
    """One batch tile: x (tb, H); wt (H, H) == W^T; p (3, H) = [b; gamma; beta]."""
    x = x_ref[...]                                   # (tb, H), native dtype
    wt = wt_ref[...]                                 # (H, H), native dtype
    p = p_ref[...].astype(jnp.float32)               # (3, H)
    b = p[0:1, :]
    gamma = p[1:2, :]
    beta = p[2:3, :]

    # Linear: y = x @ W^T + b  (MXU, f32 accumulation)
    y = jnp.dot(x, wt, preferred_element_type=jnp.float32) + b   # (tb, H) f32

    # LayerNorm over the feature axis: one-pass mean / biased variance.
    h = y.shape[-1]
    inv_h = jnp.float32(1.0 / h)
    s1 = jnp.sum(y, axis=-1, keepdims=True)
    s2 = jnp.sum(y * y, axis=-1, keepdims=True)
    mean = s1 * inv_h
    var = s2 * inv_h - mean * mean
    inv_std = jax.lax.rsqrt(var + LN_EPS)
    normed = (y - mean) * inv_std * gamma + beta

    # Residual + sigmoid (EUP).
    z = normed + x.astype(jnp.float32)
    o_ref[...] = jax.nn.sigmoid(z).astype(o_ref.dtype)


def prepare_params(w, b, gamma, beta):
    """One-time parameter setup (hoisted out of the hot path).

    w: (H, H) in PyTorch (out, in) layout; b/gamma/beta: (H,).
    Returns W^T (so the kernel does x @ W^T directly) and a fused (3, H) array.
    """
    wt = jnp.asarray(w).T
    pvec = jnp.stack(
        [jnp.asarray(b), jnp.asarray(gamma), jnp.asarray(beta)], axis=0
    )  # (3, H)
    return wt, pvec


def _choose_tb(B, H, itemsize=4):
    """Pick a batch-tile size: multiple of 8, fits VMEM, prefers >=2 (even) grid."""
    if B % 8 != 0:
        return B  # full-array block is always legal regardless of (8,128) rule
    vmem_budget = 32 * 1024 * 1024  # conservative scoped default (v6e/v7x)
    # Resident weight + fused params are double-buffered by the pipeline.
    fixed = 2 * H * H * itemsize + 2 * 3 * H * itemsize
    avail = max(vmem_budget - fixed, 0)
    # Per batch tile: x tile + out tile, each double-buffered.
    max_rows = max(avail // (4 * H * itemsize), 8)
    candidates = [
        t for t in (1024, 512, 256, 128, 64, 32, 16, 8)
        if t <= max_rows and B % t == 0 and B // t >= 2
    ]
    if candidates:
        even = [t for t in candidates if (B // t) % 2 == 0]  # v7x: 2 TCs
        return even[0] if even else candidates[0]
    return B


@functools.partial(jax.jit, static_argnames=("tb",))
def hidden_forward(x, wt, pvec, *, tb=None):
    """x: (B, H); wt: (H, H) == W^T; pvec: (3, H) = [bias; gamma; beta]."""
    B, H = x.shape
    itemsize = jnp.dtype(x.dtype).itemsize
    if tb is None:
        tb = _choose_tb(B, H, itemsize)
    assert tb == B or (tb % 8 == 0 and B % tb == 0), (
        "tb must equal B or be a multiple of 8 that divides B"
    )

    # Raise the scoped VMEM limit only if this tiling actually needs it.
    est = 2 * H * H * itemsize + 4 * tb * H * itemsize + 2 * 3 * H * itemsize
    vmem_limit = None
    if est > 32 * 1024 * 1024:
        vmem_limit = min(int(est * 1.25), 96 * 1024 * 1024)

    grid = (B // tb,)
    return pl.pallas_call(
        hidden_kernel,
        out_shape=jax.ShapeDtypeStruct((B, H), x.dtype),
        grid_spec=pltpu.PrefetchScalarGridSpec(
            num_scalar_prefetch=0,
            grid=grid,
            in_specs=[
                pl.BlockSpec((tb, H), lambda i: (i, 0)),   # x tile
                pl.BlockSpec((H, H), lambda i: (0, 0)),    # W^T (resident)
                pl.BlockSpec((3, H), lambda i: (0, 0)),    # fused b/gamma/beta
            ],
            out_specs=pl.BlockSpec((tb, H), lambda i: (i, 0)),
        ),
        compiler_params=pltpu.CompilerParams(
            dimension_semantics=("parallel",),
            vmem_limit_bytes=vmem_limit,
        ),
    )(x, wt, pvec)
    # TODO(synk): for H large enough that the double-buffered (H,H) weight
    # no longer fits v7x's 64 MiB VMEM, add a K-tiled grid axis with an f32
    # accumulator scratch (finalize LN/sigmoid on the last k step) or store
    # the weight in bf16.


def hidden_reference(x, w, b, gamma, beta):
    y = x @ w.T + b
    mean = jnp.mean(y, axis=-1, keepdims=True)
    var = jnp.mean((y - mean) ** 2, axis=-1, keepdims=True)
    normed = (y - mean) * jax.lax.rsqrt(var + LN_EPS) * gamma + beta
    return jax.nn.sigmoid(normed + x)


if __name__ == "__main__":
    # Small shapes: batch=8, hidden=128 (lane-aligned analogue of hidden_size=100)
    B, H = 8, 128
    key = jax.random.PRNGKey(0)
    kx, kw, kb = jax.random.split(key, 3)

    x = jax.random.normal(kx, (B, H), dtype=jnp.float32)
    bound = 1.0 / (H ** 0.5)
    w = jax.random.uniform(kw, (H, H), minval=-bound, maxval=bound, dtype=jnp.float32)
    b = jax.random.uniform(kb, (H,), minval=-bound, maxval=bound, dtype=jnp.float32)
    gamma = jnp.ones((H,), dtype=jnp.float32)   # LayerNorm weight init
    beta = jnp.zeros((H,), dtype=jnp.float32)   # LayerNorm bias init

    # One-time parameter setup (transpose + fuse), outside the hot path.
    wt, pvec = prepare_params(w, b, gamma, beta)
    wt, pvec = jax.block_until_ready((wt, pvec))

    out = hidden_forward(x, wt, pvec)
    out = jax.block_until_ready(out)

    ref = hidden_reference(x, w, b, gamma, beta)
    assert jnp.allclose(out, ref, atol=1e-5, rtol=1e-5), "mismatch vs reference"

    print("KERNEL_OK")
</pallas_src>

<mosaic_0001>
module attributes {stable_mosaic.version = 11 : i64} {
  func.func @hidden_kernel(%arg0: i32, %arg1: memref<8x128xf32, #tpu.memory_space<vmem>>, %arg2: memref<128x128xf32, #tpu.memory_space<vmem>>, %arg3: memref<3x128xf32, #tpu.memory_space<vmem>>, %arg4: memref<8x128xf32, #tpu.memory_space<vmem>>) attributes {dimension_semantics = [#tpu.dimension_semantics<parallel>], iteration_bounds = array<i64: 1>, scalar_prefetch = 0 : i64, scratch_operands = 0 : i64, tpu.core_type = #tpu.core_type<tc>, window_params = [{transform_indices = @transform_0, window_bounds = array<i64: 8, 128>}, {pipeline_mode = #tpu.pipeline_mode<synchronous>, transform_indices = @transform_1, window_bounds = array<i64: 128, 128>}, {pipeline_mode = #tpu.pipeline_mode<synchronous>, transform_indices = @transform_2, window_bounds = array<i64: 3, 128>}, {transform_indices = @transform_3, window_bounds = array<i64: 8, 128>}]} {
    %c0 = arith.constant 0 : index
    %c0_0 = arith.constant 0 : index
    %0 = vector.load %arg1[%c0, %c0_0] : memref<8x128xf32, #tpu.memory_space<vmem>>, vector<8x128xf32>
    %c0_1 = arith.constant 0 : index
    %c0_2 = arith.constant 0 : index
    %1 = vector.load %arg2[%c0_1, %c0_2] : memref<128x128xf32, #tpu.memory_space<vmem>>, vector<128x128xf32>
    %c0_3 = arith.constant 0 : index
    %c0_4 = arith.constant 0 : index
    %2 = vector.load %arg3[%c0_3, %c0_4] : memref<3x128xf32, #tpu.memory_space<vmem>>, vector<3x128xf32>
    %3 = vector.extract_strided_slice %2 {offsets = [0, 0], sizes = [1, 128], strides = [1, 1]} : vector<3x128xf32> to vector<1x128xf32>
    %4 = vector.extract_strided_slice %2 {offsets = [1, 0], sizes = [1, 128], strides = [1, 1]} : vector<3x128xf32> to vector<1x128xf32>
    %5 = vector.extract_strided_slice %2 {offsets = [2, 0], sizes = [1, 128], strides = [1, 1]} : vector<3x128xf32> to vector<1x128xf32>
    %cst = arith.constant dense<0.000000e+00> : vector<8x128xf32>
    %6 = tpu.matmul %0, %1, %cst {dimension_numbers = #tpu.dot_dimension_numbers<[1], [0], [0], [1], [0, 0, 1, 1], [], []>} : vector<8x128xf32>, vector<128x128xf32>, vector<8x128xf32> -> vector<8x128xf32>
    %7 = vector.broadcast %3 : vector<1x128xf32> to vector<8x128xf32>
    %8 = arith.addf %6, %7 : vector<8x128xf32>
    %cst_5 = arith.constant dense<0.000000e+00> : vector<8xf32>
    %9 = vector.multi_reduction <add>, %8, %cst_5 [1] : vector<8x128xf32> to vector<8xf32>
    %10 = vector.shape_cast %9 : vector<8xf32> to vector<8x1xf32>
    %11 = arith.mulf %8, %8 : vector<8x128xf32>
    %cst_6 = arith.constant dense<0.000000e+00> : vector<8xf32>
    %12 = vector.multi_reduction <add>, %11, %cst_6 [1] : vector<8x128xf32> to vector<8xf32>
    %13 = vector.shape_cast %12 : vector<8xf32> to vector<8x1xf32>
    %cst_7 = arith.constant 7.812500e-03 : f32
    %14 = vector.broadcast %cst_7 : f32 to vector<8x1xf32>
    %15 = arith.mulf %10, %14 : vector<8x1xf32>
    %cst_8 = arith.constant 7.812500e-03 : f32
    %16 = vector.broadcast %cst_8 : f32 to vector<8x1xf32>
    %17 = arith.mulf %13, %16 : vector<8x1xf32>
    %18 = arith.mulf %15, %15 : vector<8x1xf32>
    %19 = arith.subf %17, %18 : vector<8x1xf32>
    %cst_9 = arith.constant 9.99999974E-6 : f32
    %20 = vector.broadcast %cst_9 : f32 to vector<8x1xf32>
    %21 = arith.addf %19, %20 : vector<8x1xf32>
    %22 = math.rsqrt %21 : vector<8x1xf32>
    %23 = vector.broadcast %15 : vector<8x1xf32> to vector<8x128xf32>
    %24 = arith.subf %8, %23 : vector<8x128xf32>
    %25 = vector.broadcast %22 : vector<8x1xf32> to vector<8x128xf32>
    %26 = arith.mulf %24, %25 : vector<8x128xf32>
    %27 = vector.broadcast %4 : vector<1x128xf32> to vector<8x128xf32>
    %28 = arith.mulf %26, %27 : vector<8x128xf32>
    %29 = vector.broadcast %5 : vector<1x128xf32> to vector<8x128xf32>
    %30 = arith.addf %28, %29 : vector<8x128xf32>
    %31 = arith.addf %30, %0 : vector<8x128xf32>
    %32 = arith.negf %31 : vector<8x128xf32>
    %33 = math.exp %32 : vector<8x128xf32>
    %cst_10 = arith.constant 1.000000e+00 : f32
    %34 = vector.broadcast %cst_10 : f32 to vector<8x128xf32>
    %35 = arith.addf %34, %33 : vector<8x128xf32>
    %36 = arith.divf %34, %35 : vector<8x128xf32>
    %c0_11 = arith.constant 0 : index
    %c0_12 = arith.constant 0 : index
    %37 = vector.load %arg4[%c0_11, %c0_12] : memref<8x128xf32, #tpu.memory_space<vmem>>, vector<8x128xf32>
    tpu.vector_store %arg4[%c0_11, %c0_12], %36 {strides = array<i32>} : memref<8x128xf32, #tpu.memory_space<vmem>>, vector<8x128xf32>,
    return
  }
  func.func @transform_0(%arg0: i32) -> (i32, i32) {
    %c0_i32 = arith.constant 0 : i32
    %c0_i32_0 = arith.constant 0 : i32
    return %arg0, %c0_i32 : i32, i32
  }
  func.func @transform_1(%arg0: i32) -> (i32, i32) {
    %c0_i32 = arith.constant 0 : i32
    %c0_i32_0 = arith.constant 0 : i32
    %c0_i32_1 = arith.constant 0 : i32
    return %c0_i32, %c0_i32_0 : i32, i32
  }
  func.func @transform_2(%arg0: i32) -> (i32, i32) {
    %c0_i32 = arith.constant 0 : i32
    %c0_i32_0 = arith.constant 0 : i32
    %c0_i32_1 = arith.constant 0 : i32
    return %c0_i32, %c0_i32_0 : i32, i32
  }
  func.func @transform_3(%arg0: i32) -> (i32, i32) {
    %c0_i32 = arith.constant 0 : i32
    %c0_i32_0 = arith.constant 0 : i32
    return %arg0, %c0_i32 : i32, i32
  }
}

</mosaic_0001>

<llo_original>
// kernel: hidden_forward.1
$region0: #{hidden_forward.1}
  #allocation0 [shape = 'u32[]', space=smem, size = 0x4, offset = 0x4, fixed_abs, tag = 'smem constant byte address 0x4 - core index']
  #allocation1 [shape = 'u32[144,128]{1,0:T(1,128)}', space=vmem, size = 0x12000, scoped, tag = 'internal scratch']
  %s0 = inlined_call_operand.hbm [shape: f32[8,128], index: 0, kind: input, shape index: {}]
  %s1 = inlined_call_operand.hbm [shape: f32[128,128], index: 1, kind: input, shape index: {}]
  %s2 = inlined_call_operand.vmem [shape: f32[3,128], index: 2, kind: input, shape index: {}]
  %s3 = inlined_call_operand.hbm [shape: f32[8,128], index: 3, kind: output, shape index: {}]
  %s4 = sld [smem:[#allocation0]]
  $region30: #{hidden_forward.1} parent=0
    _
  %s6 = ssub.s32 1, %s4
  %s7 = scalar_select 0, %s6, %s4
  $region1: #{hidden_forward.1} parent=0
    #allocation2 [shape = 'u8[4096]{0}', space=vmem, size = 0x1000, scoped, tag = 'input window, operand 0, single buffered']
    #allocation3 [shape = 's32[1]{0}', space=sflag, size = 0x4, scoped, tag = 'scoped memory for hidden_forward.1']
    #allocation4 [shape = 's32[1]{0}', space=sflag, size = 0x4, scoped, tag = 'scoped memory for hidden_forward.1']
    #allocation5 [shape = 'u8[65536]{0}', space=vmem, size = 0x10000, scoped, tag = 'input window, operand 1, single buffered']
    #allocation6 [shape = 's32[1]{0}', space=sflag, size = 0x4, scoped, tag = 'scoped memory for hidden_forward.1']
    #allocation7 [shape = 'u8[4096]{0}', space=vmem, size = 0x1000, scoped, tag = 'output window, operand 0, single buffered']
    %8 = vsyncpa [#allocation3], 0
    %9 = vsyncpa [#allocation6], 0
    %10 = vsyncpa [#allocation4], 0
    // Predicated region
    $region2: #{hidden_forward.1} parent=1 // pred_check
      _
    $region3: #{hidden_forward.1} parent=1 // pred_check_branch
      %12 = sbr.rel (0) target = $region5
    $region4: #{hidden_forward.1} parent=1 // pred_region
      %s14 = ssub.s32 128, 128
      %15 = vsyncadd [#allocation3], %s14
      %s17 = sshll.u32 [#allocation2], 4
      %s18 = int_to_ptr.vmem [resolvable:$true] %s17
      %20 = dma.hbm_to_vmem [thread:$0]  %s0, 128, %s18, [#allocation3]
    $region5: #{hidden_forward.1} parent=1 // pred_fallthru
      _
    // Predicated region
    $region6: #{hidden_forward.1} parent=1 // pred_check
      _
    $region7: #{hidden_forward.1} parent=1 // pred_check_branch
      %22 = sbr.rel (0) target = $region9
    $region8: #{hidden_forward.1} parent=1 // pred_region
      %s24 = ssub.s32 2048, 2048
      %25 = vsyncadd [#allocation6], %s24
      %s26 = sshll.u32 [#allocation5], 4
      %s27 = int_to_ptr.vmem [resolvable:$true] %s26
      %32 = dma.hbm_to_vmem [thread:$0]  %s1, 2048, %s27, [#allocation6], 128, 128, 8
    $region9: #{hidden_forward.1} parent=1 // pred_fallthru
      _
    // Predicated region
    $region10: #{hidden_forward.1} parent=1 // pred_check
      _
    $region11: #{hidden_forward.1} parent=1 // pred_check_branch
      %34 = sbr.rel (0) target = $region13
    $region12: #{hidden_forward.1} parent=1 // pred_region
      _
    $region13: #{hidden_forward.1} parent=1 // pred_fallthru
      _
    // Predicated region
    $region14: #{hidden_forward.1} parent=1 // pred_check
      _
    $region15: #{hidden_forward.1} parent=1 // pred_check_branch
      %36 = sbr.rel (0) target = $region17
    $region16: #{hidden_forward.1} parent=1 // pred_region
      %37 = dma.done [#allocation3], 128
    $region17: #{hidden_forward.1} parent=1 // pred_fallthru
      _
    // Predicated region
    $region18: #{hidden_forward.1} parent=1 // pred_check
      _
    $region19: #{hidden_forward.1} parent=1 // pred_check_branch
      %39 = sbr.rel (0) target = $region21
    $region20: #{hidden_forward.1} parent=1 // pred_region
      %40 = dma.done [#allocation6], 2048
    $region21: #{hidden_forward.1} parent=1 // pred_fallthru
      _
    %v41 = vld [vmem:[#allocation2] sm:$0xff]
    %v42 = vld [vmem:[#allocation5] sm:$0xff]
    %v43 = vld [vmem:[#allocation5 + $0x8] sm:$0xff]
    %v44 = vld [vmem:[#allocation5 + $0x10] sm:$0xff]
    %v45 = vld [vmem:[#allocation5 + $0x18] sm:$0xff]
    %v46 = vld [vmem:[#allocation5 + $0x20] sm:$0xff]
    %v47 = vld [vmem:[#allocation5 + $0x28] sm:$0xff]
    %v48 = vld [vmem:[#allocation5 + $0x30] sm:$0xff]
    %v49 = vld [vmem:[#allocation5 + $0x38] sm:$0xff]
    %v50 = vld [vmem:[#allocation5 + $0x40] sm:$0xff]
    %v51 = vld [vmem:[#allocation5 + $0x48] sm:$0xff]
    %v52 = vld [vmem:[#allocation5 + $0x50] sm:$0xff]
    %v53 = vld [vmem:[#allocation5 + $0x58] sm:$0xff]
    %v54 = vld [vmem:[#allocation5 + $0x60] sm:$0xff]
    %v55 = vld [vmem:[#allocation5 + $0x68] sm:$0xff]
    %v56 = vld [vmem:[#allocation5 + $0x70] sm:$0xff]
    %v57 = vld [vmem:[#allocation5 + $0x78] sm:$0xff]
    %v58 = vld [vmem:[%s2] sm:$0x7]
    %v59 = vlaneseq
    %v60 = vshrl.u32 %v59, 7
    %v61 = vsub.s32 0, %v60
    %v62 = vrot.slane %v58, %v61
    %63 = vmatprep.subr.mxu0 0.0
    %64 = vmatpush1.msra.mxu0 %v42
    %65 = vmatprep.subr.mxu0 0.0
    %66 = vmatpush1.msra.mxu0 %v43
    %67 = vmatprep.subr.mxu0 0.0
    %68 = vmatpush1.msra.mxu0 %v44
    %69 = vmatprep.subr.mxu0 0.0
    %70 = vmatpush1.msra.mxu0 %v45
    %71 = vmatprep.subr.mxu0 0.0
    %72 = vmatpush1.msra.mxu0 %v46
    %73 = vmatprep.subr.mxu0 0.0
    %74 = vmatpush1.msra.mxu0 %v47
    %75 = vmatprep.subr.mxu0 0.0
    %76 = vmatpush1.msra.mxu0 %v48
    %77 = vmatprep.subr.mxu0 0.0
    %78 = vmatpush1.msra.mxu0 %v49
    %79 = vmatprep.subr.mxu0 0.0
    %80 = vmatpush1.msra.mxu0 %v50
    %81 = vmatprep.subr.mxu0 0.0
    %82 = vmatpush1.msra.mxu0 %v51
    %83 = vmatprep.subr.mxu0 0.0
    %84 = vmatpush1.msra.mxu0 %v52
    %85 = vmatprep.subr.mxu0 0.0
    %86 = vmatpush1.msra.mxu0 %v53
    %87 = vmatprep.subr.mxu0 0.0
    %88 = vmatpush1.msra.mxu0 %v54
    %89 = vmatprep.subr.mxu0 0.0
    %90 = vmatpush1.msra.mxu0 %v55
    %91 = vmatprep.subr.mxu0 0.0
    %92 = vmatpush1.msra.mxu0 %v56
    %93 = vmatprep.subr.mxu0 0.0
    %94 = vmatpush1.msra.mxu0 %v57
    %95 = vmatprep.subr.mxu0 0.0
    %96 = vmatpush1.msra.mxu0 0.0
    %97 = vmatprep.subr.mxu0 0.0
    %98 = vmatpush1.msra.mxu0 0.0
    %99 = vmatprep.subr.mxu0 0.0
    %100 = vmatpush1.msra.mxu0 0.0
    %101 = vmatprep.subr.mxu0 0.0
    %102 = vmatpush1.msra.mxu0 0.0
    %103 = vmatprep.subr.mxu0 0.0
    %104 = vmatpush1.msra.mxu0 0.0
    %105 = vmatprep.subr.mxu0 0.0
    %106 = vmatpush1.msra.mxu0 0.0
    %107 = vmatprep.subr.mxu0 0.0
    %108 = vmatpush1.msra.mxu0 0.0
    %109 = vmatprep.subr.mxu0 0.0
    %110 = vmatpush1.msra.mxu0 0.0
    %111 = vmatprep.subr.mxu0 0.0
    %112 = vmatpush1.msra.mxu0 0.0
    %113 = vmatprep.subr.mxu0 0.0
    %114 = vmatpush1.msra.mxu0 0.0
    %115 = vmatprep.subr.mxu0 0.0
    %116 = vmatpush1.msra.mxu0 0.0
    %117 = vmatprep.subr.mxu0 0.0
    %118 = vmatpush1.msra.mxu0 0.0
    %119 = vmatprep.subr.mxu0 0.0
    %120 = vmatpush1.msra.mxu0 0.0
    %121 = vmatprep.subr.mxu0 0.0
    %122 = vmatpush1.msra.mxu0 0.0
    %123 = vmatprep.subr.mxu0 0.0
    %124 = vmatpush1.msra.mxu0 0.0
    %125 = vmatprep.subr.mxu0 0.0
    %126 = vmatpush1.msra.mxu0 0.0
    %127 = vmatprep.mubr.f32.mxu0 0.0
    %128 = vmatmul.mubr.f32.gmra.mrb[0].mxu0 %v41
    %v129 = vpop.f32.mrb[0].mxu0
    %v130 = vadd.f32 %v62, %v129
    %v131 = vpop.f32.mrb[0].mxu0
    %132 = vdwg.mxu0
    %133 = vadd.xlane.f32.xlu0 %v130
    %v134 = vpop.xlane.xlu0 %133
    %v135 = vmul.f32 %v130, %v130
    %136 = vadd.xlane.f32.xlu0 %v135
    %v137 = vpop.xlane.xlu0 %136
    %v138 = vmul.f32 %v134, 0.0078125
    %v139 = vmul.f32 %v137, 0.0078125
    %v140 = vmul.f32 %v138, %v138
    %v141 = vsub.f32 %v139, %v140
    %v142 = vadd.f32 %v141, 1e-05
    %v143 = vrsqrt.pop %v142
    %v144 = vsub.f32 %v130, %v138
    %v145 = vmul.f32 %v144, %v143
    %v146 = vlaneseq
    %v147 = vshrl.u32 %v146, 7
    %v148 = vsub.s32 1, %v147
    %v149 = vrot.slane %v58, %v148
    %v150 = vmul.f32 %v145, %v149
    %v151 = vlaneseq
    %v152 = vshrl.u32 %v151, 7
    %v153 = vsub.s32 2, %v152
    %v154 = vrot.slane %v58, %v153
    %v155 = vadd.f32 %v150, %v154
    %v156 = vadd.f32 %v155, %v41
    %v157 = vxor.u32 %v156, 2147483648
    %v158 = vmul.f32 %v157, 1.442695
    %v159 = vpow.pop %v158
    %v160 = vadd.f32 %v159, 1.0
    %v161 = vrcp.pop %v160
    %v162 = vmul.f32 1.0, %v161
    %163 = vst [vmem:[#allocation7] sm:$0xff] %v162
    // Predicated region
    $region22: #{hidden_forward.1} parent=1 // pred_check
      _
    $region23: #{hidden_forward.1} parent=1 // pred_check_branch
      %165 = sbr.rel (0) target = $region25
    $region24: #{hidden_forward.1} parent=1 // pred_region
      %s167 = ssub.s32 128, 128
      %168 = vsyncadd [#allocation4], %s167
      %s170 = sshll.u32 [#allocation7], 4
      %s171 = int_to_ptr.vmem [resolvable:$true] %s170
      %173 = dma.vmem_to_hbm [thread:$0]  %s171, 128, %s3, [#allocation4]
    $region25: #{hidden_forward.1} parent=1 // pred_fallthru
      _
    // Predicated region
    $region26: #{hidden_forward.1} parent=1 // pred_check
      _
    $region27: #{hidden_forward.1} parent=1 // pred_check_branch
      %175 = sbr.rel (0) target = $region29
    $region28: #{hidden_forward.1} parent=1 // pred_region
      %176 = dma.done [#allocation4], 128
    $region29: #{hidden_forward.1} parent=1 // pred_fallthru
      _
    %177 = vsyncpa [#allocation3], 1
    %178 = vsyncpa [#allocation6], 1
    %179 = vsyncpa [#allocation4], 1

</llo_original>
